<compile_context>
chip_gen: v6e
topology: v6e:2x2x1
jax: 0.10.0
libtpu: 0.0.40
codegen_flags: <defaults>
</compile_context>

<pallas_src>
import functools

import jax
import jax.numpy as jnp
from jax.experimental import pallas as pl
from jax.experimental.pallas import tpu as pltpu


# ---------------------------------------------------------------------------
# Fused gcn kernel (one batch-block per grid step):
#   out[b] = bias + concat_k( A_k-hop(x[b]) ) @ M2d
# ---------------------------------------------------------------------------
def _fused_gcn_kernel(x_ref, *refs, support_is_batched, order, compute_dtype):
    """Refs:
      x_ref : (Nb, V, C*L)                  compute_dtype (pre-cast in glue)
      a refs: (V, V) static / (Nb, V, V)    compute_dtype
      m_ref : (n_terms*C*L, Cout*L)         compute_dtype (kron-folded 1x1 weight)
      b_ref : (1, Cout*L)                   float32
      o_ref : (Nb, V, Cout*L)
    """
    n_sup = len(support_is_batched)
    a_refs = refs[:n_sup]
    m_ref = refs[n_sup]
    b_ref = refs[n_sup + 1]
    o_ref = refs[n_sup + 2]

    nb, v, _col = o_ref.shape
    x0 = x_ref[...]                      # already compute_dtype — no in-kernel cast

    parts = []
    for s, batched in enumerate(support_is_batched):
        if batched:
            a = a_refs[s][...]                               # (Nb, V, V)
        else:
            # Static adjacency: single HBM/VMEM copy, cheap broadcast to the block.
            a = jnp.broadcast_to(a_refs[s][...], (nb, v, v))
        h = x0
        for _hop in range(order):
            # Graph propagation on the MXU with f32 accumulation.
            h_f32 = jnp.einsum("bvw,bwk->bvk", a, h,
                               preferred_element_type=jnp.float32)
            # One deliberate re-cast per hop result: feeds both the next hop and
            # the fused channel-mix matmul (speed over a pure-f32 chain for bf16;
            # identity when compute_dtype is f32).
            h = h_f32.astype(compute_dtype)
            parts.append(h)

    # VMEM-resident "concat" along lanes -> a single channel-mix matmul with
    # K = n_terms*C*L instead of n_terms tiny K=C*L matmuls.
    hcat = jnp.concatenate(parts, axis=-1)               # (Nb, V, n_terms*C*L)
    out = jnp.einsum("bvk,ko->bvo", hcat, m_ref[...],
                     preferred_element_type=jnp.float32)
    out = out + b_ref[...]                                # (1, Cout*L) broadcasts
    o_ref[...] = out.astype(o_ref.dtype)


# ---------------------------------------------------------------------------
# gcn.forward (inference)
# ---------------------------------------------------------------------------
def gcn_forward(x, support, w, b, *, order=1, dropout=0.3,
                compute_dtype=jnp.bfloat16, block_n=None):
    """Pallas port of MepoGNN.gcn.forward.

    x: (N, C, V, L)   support: list of (V,V) or (N,V,V)
    w: (Cout, order*len(support)*C)   b: (Cout,)
    """
    n, c, v, l = x.shape
    cout = w.shape[0]
    n_sup = len(support)
    n_terms = n_sup * order
    k_tot = n_terms * c * l
    assert w.shape == (cout, n_terms * c), w.shape

    # ---- plain-JAX glue: layout plumbing + one-time casts --------------------
    # (N, C, V, L) -> (N, V, C*L): propagation becomes a lane-dense batched matmul.
    x_vcl = jnp.transpose(x, (0, 2, 1, 3)).reshape(n, v, c * l).astype(compute_dtype)
    support_c = [a.astype(compute_dtype) for a in support]

    # Fold each concat-slice of the 1x1-conv weight into M_k = kron(W_k^T, I_L):
    #   (h @ M_k)[v, o*L + l] == sum_c W_k[o, c] * h[v, c*L + l]
    # Stack the M_k along rows -> one 2-D weight for the fused channel mix.
    eye_l = jnp.eye(l, dtype=w.dtype)
    m_list = [jnp.kron(w[:, k * c:(k + 1) * c].T, eye_l)   # (C*L, Cout*L) each
              for k in range(n_terms)]                      # torch.cat term order
    m2d = jnp.concatenate(m_list, axis=0).astype(compute_dtype)  # (n_terms*C*L, Cout*L)

    # Bias laid out along lanes: b_row[0, o*L + l] = b[o]   (kept f32)
    b_row = jnp.repeat(b, l).reshape(1, cout * l).astype(jnp.float32)

    # Batch block: amortize ~0.35us per-grid-step overhead across several batches.
    if block_n is None:
        block_n = min(n, 8)
    while n % block_n != 0:
        block_n -= 1
    grid_n = n // block_n

    support_is_batched = tuple(a.ndim == 3 for a in support)
    a_specs = []
    for batched in support_is_batched:
        if batched:
            a_specs.append(pl.BlockSpec((block_n, v, v), lambda i: (i, 0, 0)))
        else:
            # Static adjacency: constant index_map -> one resident copy, reused.
            a_specs.append(pl.BlockSpec((v, v), lambda i: (0, 0)))

    itemsize = jnp.dtype(compute_dtype).itemsize
    flops = (n * n_terms * 2 * v * v * c * l            # graph propagation
             + n * 2 * v * k_tot * cout * l)            # fused channel mix
    bytes_accessed = (x_vcl.size * itemsize
                      + sum(a.size for a in support_c) * itemsize
                      + m2d.size * itemsize
                      + b_row.size * 4
                      + n * v * cout * l * jnp.dtype(x.dtype).itemsize)

    out_vol = pl.pallas_call(
        functools.partial(
            _fused_gcn_kernel,
            support_is_batched=support_is_batched,
            order=order,
            compute_dtype=compute_dtype,
        ),
        out_shape=jax.ShapeDtypeStruct((n, v, cout * l), x.dtype),
        grid=(grid_n,),
        in_specs=[pl.BlockSpec((block_n, v, c * l), lambda i: (i, 0, 0))] + a_specs + [
            pl.BlockSpec((k_tot, cout * l), lambda i: (0, 0)),
            pl.BlockSpec((1, cout * l), lambda i: (0, 0)),
        ],
        out_specs=pl.BlockSpec((block_n, v, cout * l), lambda i: (i, 0, 0)),
        compiler_params=pltpu.CompilerParams(
            dimension_semantics=("parallel",),
            vmem_limit_bytes=32 * 1024 * 1024,
        ),
        cost_estimate=pl.CostEstimate(flops=flops, transcendentals=0,
                                      bytes_accessed=bytes_accessed),
    )(x_vcl, *support_c, m2d, b_row)

    # (N, V, Cout*L) -> (N, Cout, V, L)  (glue reshape/transpose of the output slab;
    # Cout*L stays a multiple of 128 at these shapes -> unmasked lane-dense stores)
    out = out_vol.reshape(n, v, cout, l).transpose(0, 2, 1, 3)
    # TODO(synk): F.dropout is identity in eval mode; training-mode RNG dropout not replicated.
    return out


# ---------------------------------------------------------------------------
# Pure-JAX reference (mirrors the PyTorch code) for correctness checks
# ---------------------------------------------------------------------------
def gcn_reference(x, support, w, b, order=1):
    def nconv_ref(x_, a_):
        if a_.ndim == 2:
            return jnp.einsum("vw,ncwl->ncvl", a_, x_)
        return jnp.einsum("nvw,ncwl->ncvl", a_, x_)

    out = []
    for a in support:
        x1 = nconv_ref(x, a)
        out.append(x1)
        for _k in range(2, order + 1):
            x2 = nconv_ref(x1, a)
            out.append(x2)
            x1 = x2
    h = jnp.concatenate(out, axis=1)
    return jnp.einsum("oi,nivl->novl", w, h) + b[None, :, None, None]


if __name__ == "__main__":
    # Small shapes consistent with the module's gconv block.
    N, C, V, L = 2, 4, 16, 8          # batch, dilation_channels, nodes, time steps
    Cout, support_len = 16, 2         # residual_channels, supports_len

    key = jax.random.PRNGKey(0)
    kx, ka1, ka2, kw1, kb1, kw2, kb2 = jax.random.split(key, 7)

    x = jax.random.normal(kx, (N, C, V, L), jnp.float32)
    # static adjacency (2D) and dynamic adjacency (3D, per-batch), row-stochastic
    a1 = jax.nn.softmax(jax.random.normal(ka1, (V, V), jnp.float32), axis=-1)
    a2 = jax.nn.softmax(jax.random.normal(ka2, (N, V, V), jnp.float32), axis=-1)
    support = [a1, a2]

    # ---- case 1: order=1, f32 matmul operands (tight tolerance) -------------
    order = 1
    cin_mlp = order * support_len * C
    bound = 1.0 / (cin_mlp ** 0.5)
    w1 = jax.random.uniform(kw1, (Cout, cin_mlp), jnp.float32, -bound, bound)
    b1 = jax.random.uniform(kb1, (Cout,), jnp.float32, -bound, bound)

    out1 = jax.block_until_ready(
        gcn_forward(x, support, w1, b1, order=order, compute_dtype=jnp.float32))
    ref1 = gcn_reference(x, support, w1, b1, order=order)
    assert out1.shape == (N, Cout, V, L), out1.shape
    err1 = float(jnp.max(jnp.abs(out1 - ref1)))
    assert jnp.allclose(out1, ref1, atol=1e-4, rtol=1e-4), f"f32 max abs err = {err1}"

    # ---- case 2: order=2, bf16 matmul operands (default), f32 accumulation --
    order = 2
    cin_mlp = order * support_len * C
    bound = 1.0 / (cin_mlp ** 0.5)
    w2 = jax.random.uniform(kw2, (Cout, cin_mlp), jnp.float32, -bound, bound)
    b2 = jax.random.uniform(kb2, (Cout,), jnp.float32, -bound, bound)

    out2 = jax.block_until_ready(
        gcn_forward(x, support, w2, b2, order=order, compute_dtype=jnp.bfloat16))
    ref2 = gcn_reference(x, support, w2, b2, order=order)
    assert out2.shape == (N, Cout, V, L), out2.shape
    err2 = float(jnp.max(jnp.abs(out2 - ref2)))
    assert jnp.allclose(out2, ref2, atol=5e-2, rtol=5e-2), f"bf16 max abs err = {err2}"

    print("KERNEL_OK")
</pallas_src>

<mosaic_0001>
module attributes {stable_mosaic.version = 11 : i64} {
  func.func @_fused_gcn_kernel(%arg0: i32, %arg1: memref<2x16x32xf32, #tpu.memory_space<vmem>>, %arg2: memref<16x16xf32, #tpu.memory_space<vmem>>, %arg3: memref<2x16x16xf32, #tpu.memory_space<vmem>>, %arg4: memref<64x128xf32, #tpu.memory_space<vmem>>, %arg5: memref<1x128xf32, #tpu.memory_space<vmem>>, %arg6: memref<2x16x128xf32, #tpu.memory_space<vmem>>) attributes {dimension_semantics = [#tpu.dimension_semantics<parallel>], iteration_bounds = array<i64: 1>, scalar_prefetch = 0 : i64, scratch_operands = 0 : i64, tpu.core_type = #tpu.core_type<tc>, window_params = [{transform_indices = @transform_0, window_bounds = array<i64: 2, 16, 32>}, {pipeline_mode = #tpu.pipeline_mode<synchronous>, transform_indices = @transform_1, window_bounds = array<i64: 16, 16>}, {transform_indices = @transform_2, window_bounds = array<i64: 2, 16, 16>}, {pipeline_mode = #tpu.pipeline_mode<synchronous>, transform_indices = @transform_3, window_bounds = array<i64: 64, 128>}, {pipeline_mode = #tpu.pipeline_mode<synchronous>, transform_indices = @transform_4, window_bounds = array<i64: 1, 128>}, {transform_indices = @transform_5, window_bounds = array<i64: 2, 16, 128>}]} {
    %c0 = arith.constant 0 : index
    %c0_0 = arith.constant 0 : index
    %c0_1 = arith.constant 0 : index
    %0 = vector.load %arg1[%c0, %c0_0, %c0_1] : memref<2x16x32xf32, #tpu.memory_space<vmem>>, vector<2x16x32xf32>
    %c0_2 = arith.constant 0 : index
    %c0_3 = arith.constant 0 : index
    %1 = vector.load %arg2[%c0_2, %c0_3] : memref<16x16xf32, #tpu.memory_space<vmem>>, vector<16x16xf32>
    %2 = vector.shape_cast %1 : vector<16x16xf32> to vector<1x16x16xf32>
    %3 = vector.broadcast %2 : vector<1x16x16xf32> to vector<2x16x16xf32>
    "tpu.trace_start"() <{level = 10 : i32, message = "bvw,bwk->bvk"}> : () -> ()
    %cst = arith.constant dense<0.000000e+00> : vector<2x16x32xf32>
    %4 = tpu.matmul %3, %0, %cst {dimension_numbers = #tpu.dot_dimension_numbers<[2], [1], [1], [2], [0, 0, 0, 1, 1, 2], [0], [0]>} : vector<2x16x16xf32>, vector<2x16x32xf32>, vector<2x16x32xf32> -> vector<2x16x32xf32>
    "tpu.trace_stop"() : () -> ()
    %c0_4 = arith.constant 0 : index
    %c0_5 = arith.constant 0 : index
    %c0_6 = arith.constant 0 : index
    %5 = vector.load %arg3[%c0_4, %c0_5, %c0_6] : memref<2x16x16xf32, #tpu.memory_space<vmem>>, vector<2x16x16xf32>
    "tpu.trace_start"() <{level = 10 : i32, message = "bvw,bwk->bvk"}> : () -> ()
    %cst_7 = arith.constant dense<0.000000e+00> : vector<2x16x32xf32>
    %6 = tpu.matmul %5, %0, %cst_7 {dimension_numbers = #tpu.dot_dimension_numbers<[2], [1], [1], [2], [0, 0, 0, 1, 1, 2], [0], [0]>} : vector<2x16x16xf32>, vector<2x16x32xf32>, vector<2x16x32xf32> -> vector<2x16x32xf32>
    "tpu.trace_stop"() : () -> ()
    %7 = tpu.concatenate %4, %6 in 2 : vector<2x16x32xf32>, vector<2x16x32xf32> -> vector<2x16x64xf32>
    %c0_8 = arith.constant 0 : index
    %c0_9 = arith.constant 0 : index
    %8 = vector.load %arg4[%c0_8, %c0_9] : memref<64x128xf32, #tpu.memory_space<vmem>>, vector<64x128xf32>
    "tpu.trace_start"() <{level = 10 : i32, message = "bvk,ko->bvo"}> : () -> ()
    %cst_10 = arith.constant dense<0.000000e+00> : vector<2x16x128xf32>
    %9 = tpu.matmul %7, %8, %cst_10 {dimension_numbers = #tpu.dot_dimension_numbers<[2], [0], [0, 1], [1], [0, 0, 0, 1, 1, 1], [], []>} : vector<2x16x64xf32>, vector<64x128xf32>, vector<2x16x128xf32> -> vector<2x16x128xf32>
    "tpu.trace_stop"() : () -> ()
    %c0_11 = arith.constant 0 : index
    %c0_12 = arith.constant 0 : index
    %10 = vector.load %arg5[%c0_11, %c0_12] : memref<1x128xf32, #tpu.memory_space<vmem>>, vector<1x128xf32>
    %11 = vector.shape_cast %10 : vector<1x128xf32> to vector<1x1x128xf32>
    %12 = vector.broadcast %11 : vector<1x1x128xf32> to vector<2x16x128xf32>
    %13 = arith.addf %9, %12 : vector<2x16x128xf32>
    %c0_13 = arith.constant 0 : index
    %c0_14 = arith.constant 0 : index
    %c0_15 = arith.constant 0 : index
    %14 = vector.load %arg6[%c0_13, %c0_14, %c0_15] : memref<2x16x128xf32, #tpu.memory_space<vmem>>, vector<2x16x128xf32>
    tpu.vector_store %arg6[%c0_13, %c0_14, %c0_15], %13 {strides = array<i32>} : memref<2x16x128xf32, #tpu.memory_space<vmem>>, vector<2x16x128xf32>,
    return
  }
  func.func @transform_0(%arg0: i32) -> (i32, i32, i32) {
    %c0_i32 = arith.constant 0 : i32
    %c0_i32_0 = arith.constant 0 : i32
    %c0_i32_1 = arith.constant 0 : i32
    return %arg0, %c0_i32, %c0_i32_0 : i32, i32, i32
  }
  func.func @transform_1(%arg0: i32) -> (i32, i32) {
    %c0_i32 = arith.constant 0 : i32
    %c0_i32_0 = arith.constant 0 : i32
    %c0_i32_1 = arith.constant 0 : i32
    return %c0_i32, %c0_i32_0 : i32, i32
  }
  func.func @transform_2(%arg0: i32) -> (i32, i32, i32) {
    %c0_i32 = arith.constant 0 : i32
    %c0_i32_0 = arith.constant 0 : i32
    %c0_i32_1 = arith.constant 0 : i32
    return %arg0, %c0_i32, %c0_i32_0 : i32, i32, i32
  }
  func.func @transform_3(%arg0: i32) -> (i32, i32) {
    %c0_i32 = arith.constant 0 : i32
    %c0_i32_0 = arith.constant 0 : i32
    %c0_i32_1 = arith.constant 0 : i32
    return %c0_i32, %c0_i32_0 : i32, i32
  }
  func.func @transform_4(%arg0: i32) -> (i32, i32) {
    %c0_i32 = arith.constant 0 : i32
    %c0_i32_0 = arith.constant 0 : i32
    %c0_i32_1 = arith.constant 0 : i32
    return %c0_i32, %c0_i32_0 : i32, i32
  }
  func.func @transform_5(%arg0: i32) -> (i32, i32, i32) {
    %c0_i32 = arith.constant 0 : i32
    %c0_i32_0 = arith.constant 0 : i32
    %c0_i32_1 = arith.constant 0 : i32
    return %arg0, %c0_i32, %c0_i32_0 : i32, i32, i32
  }
}

</mosaic_0001>

<llo_original>
// kernel: tpu_custom_call.1
$region0: #{tpu_custom_call.1}
  #allocation0 [shape = 'u32[]', space=smem, size = 0x4, offset = 0x4, fixed_abs, tag = 'smem constant byte address 0x4 - core index']
  #allocation1 [shape = 'u32[144,128]{1,0:T(1,128)}', space=vmem, size = 0x12000, scoped, tag = 'internal scratch']
  %s0 = inlined_call_operand.hbm [shape: f32[2,16,32], index: 0, kind: input, shape index: {}]
  %s1 = inlined_call_operand.hbm [shape: f32[16,16], index: 1, kind: input, shape index: {}]
  %s2 = inlined_call_operand.hbm [shape: f32[2,16,16], index: 2, kind: input, shape index: {}]
  %s3 = inlined_call_operand.hbm [shape: f32[64,128], index: 3, kind: input, shape index: {}]
  %s4 = inlined_call_operand.vmem [shape: f32[1,128], index: 4, kind: input, shape index: {}]
  %s5 = inlined_call_operand.hbm [shape: f32[2,16,128], index: 5, kind: output, shape index: {}]
  %s6 = sld [smem:[#allocation0]]
  $region46: #{tpu_custom_call.1} parent=0
    _
  %s8 = ssub.s32 1, %s6
  %s9 = scalar_select 0, %s8, %s6
  $region1: #{tpu_custom_call.1} parent=0
    #allocation2 [shape = 'u8[16384]{0}', space=vmem, size = 0x4000, scoped, tag = 'input window, operand 0, single buffered']
    #allocation3 [shape = 's32[1]{0}', space=sflag, size = 0x4, scoped, tag = 'scoped memory for tpu_custom_call.1']
    #allocation4 [shape = 's32[1]{0}', space=sflag, size = 0x4, scoped, tag = 'scoped memory for tpu_custom_call.1']
    #allocation5 [shape = 'u8[8192]{0}', space=vmem, size = 0x2000, scoped, tag = 'input window, operand 1, single buffered']
    #allocation6 [shape = 's32[1]{0}', space=sflag, size = 0x4, scoped, tag = 'scoped memory for tpu_custom_call.1']
    #allocation7 [shape = 'u8[16384]{0}', space=vmem, size = 0x4000, scoped, tag = 'input window, operand 2, single buffered']
    #allocation8 [shape = 'u8[32768]{0}', space=vmem, size = 0x8000, scoped, tag = 'input window, operand 3, single buffered']
    #allocation9 [shape = 's32[1]{0}', space=sflag, size = 0x4, scoped, tag = 'scoped memory for tpu_custom_call.1']
    #allocation10 [shape = 'u8[16384]{0}', space=vmem, size = 0x4000, scoped, tag = 'output window, operand 0, single buffered']
    %10 = vsyncpa [#allocation3], 0
    %11 = vsyncpa [#allocation6], 0
    %12 = vsyncpa [#allocation9], 0
    %13 = vsyncpa [#allocation4], 0
    // Predicated region
    $region2: #{tpu_custom_call.1} parent=1 // pred_check
      _
    $region3: #{tpu_custom_call.1} parent=1 // pred_check_branch
      %15 = sbr.rel (0) target = $region5
    $region4: #{tpu_custom_call.1} parent=1 // pred_region
      %s17 = ssub.s32 512, 512
      %18 = vsyncadd [#allocation3], %s17
      %s19 = sshll.u32 [#allocation2], 4
      %s20 = int_to_ptr.vmem [resolvable:$true] %s19
      %25 = dma.hbm_to_vmem [thread:$0]  %s0, 512, %s20, [#allocation3], 128, 128, 8
    $region5: #{tpu_custom_call.1} parent=1 // pred_fallthru
      _
    // Predicated region
    $region6: #{tpu_custom_call.1} parent=1 // pred_check
      _
    $region7: #{tpu_custom_call.1} parent=1 // pred_check_branch
      %27 = sbr.rel (0) target = $region9
    $region8: #{tpu_custom_call.1} parent=1 // pred_region
      %s29 = ssub.s32 256, 256
      %30 = vsyncadd [#allocation6], %s29
      %s31 = sshll.u32 [#allocation5], 4
      %s32 = int_to_ptr.vmem [resolvable:$true] %s31
      %37 = dma.hbm_to_vmem [thread:$0]  %s1, 256, %s32, [#allocation6], 128, 128, 8
    $region9: #{tpu_custom_call.1} parent=1 // pred_fallthru
      _
    // Predicated region
    $region10: #{tpu_custom_call.1} parent=1 // pred_check
      _
    $region11: #{tpu_custom_call.1} parent=1 // pred_check_branch
      %39 = sbr.rel (0) target = $region13
    $region12: #{tpu_custom_call.1} parent=1 // pred_region
      %s41 = ssub.s32 512, 512
      %42 = vsyncadd [#allocation6], %s41
      %s43 = sshll.u32 [#allocation7], 4
      %s44 = int_to_ptr.vmem [resolvable:$true] %s43
      %49 = dma.hbm_to_vmem [thread:$0]  %s2, 512, %s44, [#allocation6], 128, 128, 8
    $region13: #{tpu_custom_call.1} parent=1 // pred_fallthru
      _
    // Predicated region
    $region14: #{tpu_custom_call.1} parent=1 // pred_check
      _
    $region15: #{tpu_custom_call.1} parent=1 // pred_check_branch
      %51 = sbr.rel (0) target = $region17
    $region16: #{tpu_custom_call.1} parent=1 // pred_region
      %s53 = ssub.s32 1024, 1024
      %54 = vsyncadd [#allocation9], %s53
      %s55 = sshll.u32 [#allocation8], 4
      %s56 = int_to_ptr.vmem [resolvable:$true] %s55
      %61 = dma.hbm_to_vmem [thread:$0]  %s3, 1024, %s56, [#allocation9], 128, 128, 8
    $region17: #{tpu_custom_call.1} parent=1 // pred_fallthru
      _
    // Predicated region
    $region18: #{tpu_custom_call.1} parent=1 // pred_check
      _
    $region19: #{tpu_custom_call.1} parent=1 // pred_check_branch
      %63 = sbr.rel (0) target = $region21
    $region20: #{tpu_custom_call.1} parent=1 // pred_region
      _
    $region21: #{tpu_custom_call.1} parent=1 // pred_fallthru
      _
    // Predicated region
    $region22: #{tpu_custom_call.1} parent=1 // pred_check
      _
    $region23: #{tpu_custom_call.1} parent=1 // pred_check_branch
      %65 = sbr.rel (0) target = $region25
    $region24: #{tpu_custom_call.1} parent=1 // pred_region
      %66 = dma.done [#allocation3], 512
    $region25: #{tpu_custom_call.1} parent=1 // pred_fallthru
      _
    // Predicated region
    $region26: #{tpu_custom_call.1} parent=1 // pred_check
      _
    $region27: #{tpu_custom_call.1} parent=1 // pred_check_branch
      %68 = sbr.rel (0) target = $region29
    $region28: #{tpu_custom_call.1} parent=1 // pred_region
      %69 = dma.done [#allocation6], 256
    $region29: #{tpu_custom_call.1} parent=1 // pred_fallthru
      _
    // Predicated region
    $region30: #{tpu_custom_call.1} parent=1 // pred_check
      _
    $region31: #{tpu_custom_call.1} parent=1 // pred_check_branch
      %71 = sbr.rel (0) target = $region33
    $region32: #{tpu_custom_call.1} parent=1 // pred_region
      %72 = dma.done [#allocation6], 512
    $region33: #{tpu_custom_call.1} parent=1 // pred_fallthru
      _
    // Predicated region
    $region34: #{tpu_custom_call.1} parent=1 // pred_check
      _
    $region35: #{tpu_custom_call.1} parent=1 // pred_check_branch
      %74 = sbr.rel (0) target = $region37
    $region36: #{tpu_custom_call.1} parent=1 // pred_region
      %75 = dma.done [#allocation9], 1024
    $region37: #{tpu_custom_call.1} parent=1 // pred_fallthru
      _
    %v76 = vld [vmem:[#allocation2] sm:$0xff]
    %v77 = vld [vmem:[#allocation2 + $0x8] sm:$0xff]
    %v78 = vld [vmem:[#allocation2 + $0x10] sm:$0xff]
    %v79 = vld [vmem:[#allocation2 + $0x18] sm:$0xff]
    %v80 = vld [vmem:[#allocation5] sm:$0xff]
    %v81 = vld [vmem:[#allocation5 + $0x8] sm:$0xff]
    %vm82 = vcmask 130048
    %v84 = vsel %vm82, %v80, 0
    %v87 = vsel %vm82, %v81, 0
    %89 = vmatprep.subr.mxu0 0.0
    %90 = vmatpush1.msra.mxu0 0.0
    %91 = vmatprep.subr.mxu0 0.0
    %92 = vmatpush1.msra.mxu0 0.0
    %93 = vmatprep.subr.mxu0 0.0
    %94 = vmatpush1.msra.mxu0 0.0
    %95 = vmatprep.subr.mxu0 0.0
    %96 = vmatpush1.msra.mxu0 0.0
    %97 = vmatprep.subr.mxu0 0.0
    %98 = vmatpush1.msra.mxu0 0.0
    %99 = vmatprep.subr.mxu0 0.0
    %100 = vmatpush1.msra.mxu0 0.0
    %101 = vmatprep.subr.mxu0 0.0
    %102 = vmatpush1.msra.mxu0 0.0
    %103 = vmatprep.subr.mxu0 0.0
    %104 = vmatpush1.msra.mxu0 0.0
    %105 = vmatprep.subr.mxu0 0.0
    %106 = vmatpush1.msra.mxu0 0.0
    %107 = vmatprep.subr.mxu0 0.0
    %108 = vmatpush1.msra.mxu0 0.0
    %109 = vmatprep.subr.mxu0 0.0
    %110 = vmatpush1.msra.mxu0 0.0
    %111 = vmatprep.subr.mxu0 0.0
    %112 = vmatpush1.msra.mxu0 0.0
    %113 = vmatprep.subr.mxu0 0.0
    %114 = vmatpush1.msra.mxu0 0.0
    %115 = vmatprep.subr.mxu0 0.0
    %116 = vmatpush1.msra.mxu0 0.0
    %117 = vmatprep.subr.mxu0 0.0
    %118 = vmatpush1.msra.mxu0 %v77
    %119 = vmatprep.subr.mxu0 0.0
    %120 = vmatpush1.msra.mxu0 %v76
    %121 = vmatprep.subr.mxu0 0.0
    %122 = vmatpush2.msra.mxu0 0.0
    %123 = vmatprep.subr.mxu0 0.0
    %124 = vmatpush2.msra.mxu0 0.0
    %125 = vmatprep.subr.mxu0 0.0
    %126 = vmatpush2.msra.mxu0 0.0
    %127 = vmatprep.subr.mxu0 0.0
    %128 = vmatpush2.msra.mxu0 0.0
    %129 = vmatprep.subr.mxu0 0.0
    %130 = vmatpush2.msra.mxu0 0.0
    %131 = vmatprep.subr.mxu0 0.0
    %132 = vmatpush2.msra.mxu0 0.0
    %133 = vmatprep.subr.mxu0 0.0
    %134 = vmatpush2.msra.mxu0 0.0
    %135 = vmatprep.subr.mxu0 0.0
    %136 = vmatpush2.msra.mxu0 0.0
    %137 = vmatprep.subr.mxu0 0.0
    %138 = vmatpush2.msra.mxu0 0.0
    %139 = vmatprep.subr.mxu0 0.0
    %140 = vmatpush2.msra.mxu0 0.0
    %141 = vmatprep.subr.mxu0 0.0
    %142 = vmatpush2.msra.mxu0 0.0
    %143 = vmatprep.subr.mxu0 0.0
    %144 = vmatpush2.msra.mxu0 0.0
    %145 = vmatprep.subr.mxu0 0.0
    %146 = vmatpush2.msra.mxu0 0.0
    %147 = vmatprep.subr.mxu0 0.0
    %148 = vmatpush2.msra.mxu0 0.0
    %149 = vmatprep.subr.mxu0 0.0
    %150 = vmatpush2.msra.mxu0 0.0
    %151 = vmatprep.subr.mxu0 0.0
    %152 = vmatpush2.msra.mxu0 0.0
    %153 = vmatprep.mubr.f32.mxu0 0.0
    %154 = vmatmul.mubr.f32.gmra.mxu0 %v84
    %v155 = vpop.f32.mrf.mxu0
    %v156 = vadd.f32 0.0, %v155
    %v157 = vpop.f32.mrf.mxu0
    %158 = vmatprep.mubr.f32.mxu0 0.0
    %159 = vmatmul.mubr.f32.gmra.mxu0 %v87
    %v160 = vpop.f32.mrf.mxu0
    %v161 = vadd.f32 0.0, %v160
    %v162 = vpop.f32.mrf.mxu0
    %163 = vdwg.mxu0
    %164 = vmatprep.subr.mxu0 0.0
    %165 = vmatpush1.msra.mxu0 0.0
    %166 = vmatprep.subr.mxu0 0.0
    %167 = vmatpush1.msra.mxu0 0.0
    %168 = vmatprep.subr.mxu0 0.0
    %169 = vmatpush1.msra.mxu0 0.0
    %170 = vmatprep.subr.mxu0 0.0
    %171 = vmatpush1.msra.mxu0 0.0
    %172 = vmatprep.subr.mxu0 0.0
    %173 = vmatpush1.msra.mxu0 0.0
    %174 = vmatprep.subr.mxu0 0.0
    %175 = vmatpush1.msra.mxu0 0.0
    %176 = vmatprep.subr.mxu0 0.0
    %177 = vmatpush1.msra.mxu0 0.0
    %178 = vmatprep.subr.mxu0 0.0
    %179 = vmatpush1.msra.mxu0 0.0
    %180 = vmatprep.subr.mxu0 0.0
    %181 = vmatpush1.msra.mxu0 0.0
    %182 = vmatprep.subr.mxu0 0.0
    %183 = vmatpush1.msra.mxu0 0.0
    %184 = vmatprep.subr.mxu0 0.0
    %185 = vmatpush1.msra.mxu0 0.0
    %186 = vmatprep.subr.mxu0 0.0
    %187 = vmatpush1.msra.mxu0 0.0
    %188 = vmatprep.subr.mxu0 0.0
    %189 = vmatpush1.msra.mxu0 0.0
    %190 = vmatprep.subr.mxu0 0.0
    %191 = vmatpush1.msra.mxu0 0.0
    %192 = vmatprep.subr.mxu0 0.0
    %193 = vmatpush1.msra.mxu0 %v79
    %194 = vmatprep.subr.mxu0 0.0
    %195 = vmatpush1.msra.mxu0 %v78
    %196 = vmatprep.subr.mxu0 0.0
    %197 = vmatpush2.msra.mxu0 0.0
    %198 = vmatprep.subr.mxu0 0.0
    %199 = vmatpush2.msra.mxu0 0.0
    %200 = vmatprep.subr.mxu0 0.0
    %201 = vmatpush2.msra.mxu0 0.0
    %202 = vmatprep.subr.mxu0 0.0
    %203 = vmatpush2.msra.mxu0 0.0
    %204 = vmatprep.subr.mxu0 0.0
    %205 = vmatpush2.msra.mxu0 0.0
    %206 = vmatprep.subr.mxu0 0.0
    %207 = vmatpush2.msra.mxu0 0.0
    %208 = vmatprep.subr.mxu0 0.0
    %209 = vmatpush2.msra.mxu0 0.0
    %210 = vmatprep.subr.mxu0 0.0
    %211 = vmatpush2.msra.mxu0 0.0
    %212 = vmatprep.subr.mxu0 0.0
    %213 = vmatpush2.msra.mxu0 0.0
    %214 = vmatprep.subr.mxu0 0.0
    %215 = vmatpush2.msra.mxu0 0.0
    %216 = vmatprep.subr.mxu0 0.0
    %217 = vmatpush2.msra.mxu0 0.0
    %218 = vmatprep.subr.mxu0 0.0
    %219 = vmatpush2.msra.mxu0 0.0
    %220 = vmatprep.subr.mxu0 0.0
    %221 = vmatpush2.msra.mxu0 0.0
    %222 = vmatprep.subr.mxu0 0.0
    %223 = vmatpush2.msra.mxu0 0.0
    %224 = vmatprep.subr.mxu0 0.0
    %225 = vmatpush2.msra.mxu0 0.0
    %226 = vmatprep.subr.mxu0 0.0
    %227 = vmatpush2.msra.mxu0 0.0
    %228 = vmatprep.mubr.f32.mxu0 0.0
    %229 = vmatmul.mubr.f32.gmra.mxu0 %v84
    %v230 = vpop.f32.mrf.mxu0
    %v231 = vadd.f32 0.0, %v230
    %v232 = vpop.f32.mrf.mxu0
    %233 = vmatprep.mubr.f32.mxu0 0.0
    %234 = vmatmul.mubr.f32.gmra.mxu0 %v87
    %v235 = vpop.f32.mrf.mxu0
    %v236 = vadd.f32 0.0, %v235
    %v237 = vpop.f32.mrf.mxu0
    %238 = vdwg.mxu0
    %v239 = vld [vmem:[#allocation7] sm:$0xff]
    %v240 = vld [vmem:[#allocation7 + $0x8] sm:$0xff]
    %v241 = vld [vmem:[#allocation7 + $0x10] sm:$0xff]
    %v242 = vld [vmem:[#allocation7 + $0x18] sm:$0xff]
    %v244 = vsel %vm82, %v239, 0
    %v247 = vsel %vm82, %v240, 0
    %249 = vmatprep.subr.mxu0 0.0
    %250 = vmatpush1.msra.mxu0 0.0
    %251 = vmatprep.subr.mxu0 0.0
    %252 = vmatpush1.msra.mxu0 0.0
    %253 = vmatprep.subr.mxu0 0.0
    %254 = vmatpush1.msra.mxu0 0.0
    %255 = vmatprep.subr.mxu0 0.0
    %256 = vmatpush1.msra.mxu0 0.0
    %257 = vmatprep.subr.mxu0 0.0
    %258 = vmatpush1.msra.mxu0 0.0
    %259 = vmatprep.subr.mxu0 0.0
    %260 = vmatpush1.msra.mxu0 0.0
    %261 = vmatprep.subr.mxu0 0.0
    %262 = vmatpush1.msra.mxu0 0.0
    %263 = vmatprep.subr.mxu0 0.0
    %264 = vmatpush1.msra.mxu0 0.0
    %265 = vmatprep.subr.mxu0 0.0
    %266 = vmatpush1.msra.mxu0 0.0
    %267 = vmatprep.subr.mxu0 0.0
    %268 = vmatpush1.msra.mxu0 0.0
    %269 = vmatprep.subr.mxu0 0.0
    %270 = vmatpush1.msra.mxu0 0.0
    %271 = vmatprep.subr.mxu0 0.0
    %272 = vmatpush1.msra.mxu0 0.0
    %273 = vmatprep.subr.mxu0 0.0
    %274 = vmatpush1.msra.mxu0 0.0
    %275 = vmatprep.subr.mxu0 0.0
    %276 = vmatpush1.msra.mxu0 0.0
    %277 = vmatprep.subr.mxu0 0.0
    %278 = vmatpush1.msra.mxu0 %v77
    %279 = vmatprep.subr.mxu0 0.0
    %280 = vmatpush1.msra.mxu0 %v76
    %281 = vmatprep.subr.mxu0 0.0
    %282 = vmatpush2.msra.mxu0 0.0
    %283 = vmatprep.subr.mxu0 0.0
    %284 = vmatpush2.msra.mxu0 0.0
    %285 = vmatprep.subr.mxu0 0.0
    %286 = vmatpush2.msra.mxu0 0.0
    %287 = vmatprep.subr.mxu0 0.0
    %288 = vmatpush2.msra.mxu0 0.0
    %289 = vmatprep.subr.mxu0 0.0
    %290 = vmatpush2.msra.mxu0 0.0
    %291 = vmatprep.subr.mxu0 0.0
    %292 = vmatpush2.msra.mxu0 0.0
    %293 = vmatprep.subr.mxu0 0.0
    %294 = vmatpush2.msra.mxu0 0.0
    %295 = vmatprep.subr.mxu0 0.0
    %296 = vmatpush2.msra.mxu0 0.0
    %297 = vmatprep.subr.mxu0 0.0
    %298 = vmatpush2.msra.mxu0 0.0
    %299 = vmatprep.subr.mxu0 0.0
    %300 = vmatpush2.msra.mxu0 0.0
    %301 = vmatprep.subr.mxu0 0.0
    %302 = vmatpush2.msra.mxu0 0.0
    %303 = vmatprep.subr.mxu0 0.0
    %304 = vmatpush2.msra.mxu0 0.0
    %305 = vmatprep.subr.mxu0 0.0
    %306 = vmatpush2.msra.mxu0 0.0
    %307 = vmatprep.subr.mxu0 0.0
    %308 = vmatpush2.msra.mxu0 0.0
    %309 = vmatprep.subr.mxu0 0.0
    %310 = vmatpush2.msra.mxu0 0.0
    %311 = vmatprep.subr.mxu0 0.0
    %312 = vmatpush2.msra.mxu0 0.0
    %313 = vmatprep.mubr.f32.mxu0 0.0
    %314 = vmatmul.mubr.f32.gmra.mxu0 %v244
    %v315 = vpop.f32.mrf.mxu0
    %v316 = vadd.f32 0.0, %v315
    %v317 = vpop.f32.mrf.mxu0
    %318 = vmatprep.mubr.f32.mxu0 0.0
    %319 = vmatmul.mubr.f32.gmra.mxu0 %v247
    %v320 = vpop.f32.mrf.mxu0
    %v321 = vadd.f32 0.0, %v320
    %v322 = vpop.f32.mrf.mxu0
    %323 = vdwg.mxu0
    %v325 = vsel %vm82, %v241, 0
    %v328 = vsel %vm82, %v242, 0
    %330 = vmatprep.subr.mxu0 0.0
    %331 = vmatpush1.msra.mxu0 0.0
    %332 = vmatprep.subr.mxu0 0.0
    %333 = vmatpush1.msra.mxu0 0.0
    %334 = vmatprep.subr.mxu0 0.0
    %335 = vmatpush1.msra.mxu0 0.0
    %336 = vmatprep.subr.mxu0 0.0
    %337 = vmatpush1.msra.mxu0 0.0
    %338 = vmatprep.subr.mxu0 0.0
    %339 = vmatpush1.msra.mxu0 0.0
    %340 = vmatprep.subr.mxu0 0.0
    %341 = vmatpush1.msra.mxu0 0.0
    %342 = vmatprep.subr.mxu0 0.0
    %343 = vmatpush1.msra.mxu0 0.0
    %344 = vmatprep.subr.mxu0 0.0
    %345 = vmatpush1.msra.mxu0 0.0
    %346 = vmatprep.subr.mxu0 0.0
    %347 = vmatpush1.msra.mxu0 0.0
    %348 = vmatprep.subr.mxu0 0.0
    %349 = vmatpush1.msra.mxu0 0.0
    %350 = vmatprep.subr.mxu0 0.0
    %351 = vmatpush1.msra.mxu0 0.0
    %352 = vmatprep.subr.mxu0 0.0
    %353 = vmatpush1.msra.mxu0 0.0
    %354 = vmatprep.subr.mxu0 0.0
    %355 = vmatpush1.msra.mxu0 0.0
    %356 = vmatprep.subr.mxu0 0.0
    %357 = vmatpush1.msra.mxu0 0.0
    %358 = vmatprep.subr.mxu0 0.0
    %359 = vmatpush1.msra.mxu0 %v79
    %360 = vmatprep.subr.mxu0 0.0
    %361 = vmatpush1.msra.mxu0 %v78
    %362 = vmatprep.subr.mxu0 0.0
    %363 = vmatpush2.msra.mxu0 0.0
    %364 = vmatprep.subr.mxu0 0.0
    %365 = vmatpush2.msra.mxu0 0.0
    %366 = vmatprep.subr.mxu0 0.0
    %367 = vmatpush2.msra.mxu0 0.0
    %368 = vmatprep.subr.mxu0 0.0
    %369 = vmatpush2.msra.mxu0 0.0
    %370 = vmatprep.subr.mxu0 0.0
    %371 = vmatpush2.msra.mxu0 0.0
    %372 = vmatprep.subr.mxu0 0.0
    %373 = vmatpush2.msra.mxu0 0.0
    %374 = vmatprep.subr.mxu0 0.0
    %375 = vmatpush2.msra.mxu0 0.0
    %376 = vmatprep.subr.mxu0 0.0
    %377 = vmatpush2.msra.mxu0 0.0
    %378 = vmatprep.subr.mxu0 0.0
    %379 = vmatpush2.msra.mxu0 0.0
    %380 = vmatprep.subr.mxu0 0.0
    %381 = vmatpush2.msra.mxu0 0.0
    %382 = vmatprep.subr.mxu0 0.0
    %383 = vmatpush2.msra.mxu0 0.0
    %384 = vmatprep.subr.mxu0 0.0
    %385 = vmatpush2.msra.mxu0 0.0
    %386 = vmatprep.subr.mxu0 0.0
    %387 = vmatpush2.msra.mxu0 0.0
    %388 = vmatprep.subr.mxu0 0.0
    %389 = vmatpush2.msra.mxu0 0.0
    %390 = vmatprep.subr.mxu0 0.0
    %391 = vmatpush2.msra.mxu0 0.0
    %392 = vmatprep.subr.mxu0 0.0
    %393 = vmatpush2.msra.mxu0 0.0
    %394 = vmatprep.mubr.f32.mxu0 0.0
    %395 = vmatmul.mubr.f32.gmra.mxu0 %v325
    %v396 = vpop.f32.mrf.mxu0
    %v397 = vadd.f32 0.0, %v396
    %v398 = vpop.f32.mrf.mxu0
    %399 = vmatprep.mubr.f32.mxu0 0.0
    %400 = vmatmul.mubr.f32.gmra.mxu0 %v328
    %v401 = vpop.f32.mrf.mxu0
    %v402 = vadd.f32 0.0, %v401
    %v403 = vpop.f32.mrf.mxu0
    %404 = vdwg.mxu0
    %409 = vrot.lane.b32.xlu0 %v316, 32
    %v410 = vpop.permute.xlu0 %409
    %411 = vrot.lane.b32.xlu0 %v321, 32
    %v412 = vpop.permute.xlu0 %411
    %413 = vrot.lane.b32.xlu0 %v397, 32
    %v414 = vpop.permute.xlu0 %413
    %415 = vrot.lane.b32.xlu0 %v402, 32
    %v416 = vpop.permute.xlu0 %415
    %vm421 = vcmask 261120
    %v422 = vsel %vm421, %v156, %v410
    %v423 = vsel %vm421, %v161, %v412
    %v424 = vsel %vm421, %v231, %v414
    %v425 = vsel %vm421, %v236, %v416
    %v426 = vld [vmem:[#allocation8] sm:$0xff]
    %v427 = vld [vmem:[#allocation8 + $0x8] sm:$0xff]
    %v428 = vld [vmem:[#allocation8 + $0x10] sm:$0xff]
    %v429 = vld [vmem:[#allocation8 + $0x18] sm:$0xff]
    %v430 = vld [vmem:[#allocation8 + $0x20] sm:$0xff]
    %v431 = vld [vmem:[#allocation8 + $0x28] sm:$0xff]
    %v432 = vld [vmem:[#allocation8 + $0x30] sm:$0xff]
    %v433 = vld [vmem:[#allocation8 + $0x38] sm:$0xff]
    %v434 = vld [vmem:[%s4] sm:$0x1]
    %v436 = vlaneseq
    %v437 = vshrl.u32 %v436, 7
    %v438 = vsub.s32 0, %v437
    %v439 = vrot.slane %v434, %v438
    %vm441 = vcmask 523264
    %v443 = vsel %vm441, %v422, 0
    %v446 = vsel %vm441, %v423, 0
    %v449 = vsel %vm441, %v424, 0
    %v452 = vsel %vm441, %v425, 0
    %454 = vmatprep.subr.mxu0 0.0
    %455 = vmatpush1.msra.mxu0 0.0
    %456 = vmatprep.subr.mxu0 0.0
    %457 = vmatpush1.msra.mxu0 0.0
    %458 = vmatprep.subr.mxu0 0.0
    %459 = vmatpush1.msra.mxu0 0.0
    %460 = vmatprep.subr.mxu0 0.0
    %461 = vmatpush1.msra.mxu0 0.0
    %462 = vmatprep.subr.mxu0 0.0
    %463 = vmatpush1.msra.mxu0 0.0
    %464 = vmatprep.subr.mxu0 0.0
    %465 = vmatpush1.msra.mxu0 0.0
    %466 = vmatprep.subr.mxu0 0.0
    %467 = vmatpush1.msra.mxu0 0.0
    %468 = vmatprep.subr.mxu0 0.0
    %469 = vmatpush1.msra.mxu0 0.0
    %470 = vmatprep.subr.mxu0 0.0
    %471 = vmatpush1.msra.mxu0 %v433
    %472 = vmatprep.subr.mxu0 0.0
    %473 = vmatpush1.msra.mxu0 %v432
    %474 = vmatprep.subr.mxu0 0.0
    %475 = vmatpush1.msra.mxu0 %v431
    %476 = vmatprep.subr.mxu0 0.0
    %477 = vmatpush1.msra.mxu0 %v430
    %478 = vmatprep.subr.mxu0 0.0
    %479 = vmatpush1.msra.mxu0 %v429
    %480 = vmatprep.subr.mxu0 0.0
    %481 = vmatpush1.msra.mxu0 %v428
    %482 = vmatprep.subr.mxu0 0.0
    %483 = vmatpush1.msra.mxu0 %v427
    %484 = vmatprep.subr.mxu0 0.0
    %485 = vmatpush1.msra.mxu0 %v426
    %486 = vmatprep.subr.mxu0 0.0
    %487 = vmatpush2.msra.mxu0 0.0
    %488 = vmatprep.subr.mxu0 0.0
    %489 = vmatpush2.msra.mxu0 0.0
    %490 = vmatprep.subr.mxu0 0.0
    %491 = vmatpush2.msra.mxu0 0.0
    %492 = vmatprep.subr.mxu0 0.0
    %493 = vmatpush2.msra.mxu0 0.0
    %494 = vmatprep.subr.mxu0 0.0
    %495 = vmatpush2.msra.mxu0 0.0
    %496 = vmatprep.subr.mxu0 0.0
    %497 = vmatpush2.msra.mxu0 0.0
    %498 = vmatprep.subr.mxu0 0.0
    %499 = vmatpush2.msra.mxu0 0.0
    %500 = vmatprep.subr.mxu0 0.0
    %501 = vmatpush2.msra.mxu0 0.0
    %502 = vmatprep.subr.mxu0 0.0
    %503 = vmatpush2.msra.mxu0 0.0
    %504 = vmatprep.subr.mxu0 0.0
    %505 = vmatpush2.msra.mxu0 0.0
    %506 = vmatprep.subr.mxu0 0.0
    %507 = vmatpush2.msra.mxu0 0.0
    %508 = vmatprep.subr.mxu0 0.0
    %509 = vmatpush2.msra.mxu0 0.0
    %510 = vmatprep.subr.mxu0 0.0
    %511 = vmatpush2.msra.mxu0 0.0
    %512 = vmatprep.subr.mxu0 0.0
    %513 = vmatpush2.msra.mxu0 0.0
    %514 = vmatprep.subr.mxu0 0.0
    %515 = vmatpush2.msra.mxu0 0.0
    %516 = vmatprep.subr.mxu0 0.0
    %517 = vmatpush2.msra.mxu0 0.0
    %518 = vmatprep.mubr.f32.mxu0 0.0
    %519 = vmatmul.mubr.f32.gmra.mxu0 %v443
    %v520 = vpop.f32.mrf.mxu0
    %v521 = vadd.f32 %v439, %v520
    %v522 = vpop.f32.mrf.mxu0
    %523 = vmatprep.mubr.f32.mxu0 0.0
    %524 = vmatmul.mubr.f32.gmra.mxu0 %v446
    %v525 = vpop.f32.mrf.mxu0
    %v526 = vadd.f32 %v439, %v525
    %v527 = vpop.f32.mrf.mxu0
    %528 = vmatprep.mubr.f32.mxu0 0.0
    %529 = vmatmul.mubr.f32.gmra.mxu0 %v449
    %v530 = vpop.f32.mrf.mxu0
    %v531 = vadd.f32 %v439, %v530
    %v532 = vpop.f32.mrf.mxu0
    %533 = vmatprep.mubr.f32.mxu0 0.0
    %534 = vmatmul.mubr.f32.gmra.mxu0 %v452
    %v535 = vpop.f32.mrf.mxu0
    %v536 = vadd.f32 %v439, %v535
    %v537 = vpop.f32.mrf.mxu0
    %538 = vdwg.mxu0
    %539 = vst [vmem:[#allocation10] sm:$0xff] %v521
    %540 = vst [vmem:[#allocation10 + $0x8] sm:$0xff] %v526
    %541 = vst [vmem:[#allocation10 + $0x10] sm:$0xff] %v531
    %542 = vst [vmem:[#allocation10 + $0x18] sm:$0xff] %v536
    // Predicated region
    $region38: #{tpu_custom_call.1} parent=1 // pred_check
      _
    $region39: #{tpu_custom_call.1} parent=1 // pred_check_branch
      %544 = sbr.rel (0) target = $region41
    $region40: #{tpu_custom_call.1} parent=1 // pred_region
      %s546 = ssub.s32 512, 512
      %547 = vsyncadd [#allocation4], %s546
      %s548 = sshll.u32 [#allocation10], 4
      %s549 = int_to_ptr.vmem [resolvable:$true] %s548
      %554 = dma.vmem_to_hbm [thread:$0]  %s549, 512, %s5, [#allocation4], 128, 128, 8
    $region41: #{tpu_custom_call.1} parent=1 // pred_fallthru
      _
    // Predicated region
    $region42: #{tpu_custom_call.1} parent=1 // pred_check
      _
    $region43: #{tpu_custom_call.1} parent=1 // pred_check_branch
      %556 = sbr.rel (0) target = $region45
    $region44: #{tpu_custom_call.1} parent=1 // pred_region
      %557 = dma.done [#allocation4], 512
    $region45: #{tpu_custom_call.1} parent=1 // pred_fallthru
      _
    %558 = vsyncpa [#allocation3], 1
    %559 = vsyncpa [#allocation6], 1
    %560 = vsyncpa [#allocation9], 1
    %561 = vsyncpa [#allocation4], 1

</llo_original>
